<compile_context>
chip_gen: v7x
topology: tpu7x:2x2x1
jax: 0.10.0
libtpu: 0.0.40
codegen_flags: <defaults>
</compile_context>

<pallas_src>
import functools

import jax
import jax.numpy as jnp
from jax import lax
from jax.experimental import pallas as pl
from jax.experimental.pallas import tpu as pltpu

INF = 1e9
LN_EPS = 1e-5


# ----------------------------------------------------------------------------
# helpers
# ----------------------------------------------------------------------------

def _pick_tile(n, target, align=8):
    """Largest t <= target with n % t == 0 and t % align == 0; else the full dim.
    # TODO(synk): pad + masked tail for dims with no aligned divisor so the
    # fallback never produces a single huge block (v7x 64 MiB VMEM budget)."""
    if n <= target:
        return n
    for t in range(target, 0, -1):
        if n % t == 0 and t % align == 0:
            return t
    return n


def _sigmoid(x):  # in-kernel sigmoid (exp runs on the EUP)
    return 1.0 / (1.0 + jnp.exp(-x))


def _layernorm_rows(x, gamma, beta):
    mu = jnp.mean(x, axis=-1, keepdims=True)
    xc = x - mu
    var = jnp.mean(xc * xc, axis=-1, keepdims=True)
    return xc * lax.rsqrt(var + LN_EPS) * gamma + beta


# ----------------------------------------------------------------------------
# generic fused LN + matmul kernels
# ----------------------------------------------------------------------------

def _ln_linear_kernel(x_ref, g_ref, b_ref, w_ref, bias_ref, o_ref):
    """out = LN(x) @ w + bias, row tile."""
    xn = _layernorm_rows(x_ref[...], g_ref[...], b_ref[...])
    o_ref[...] = jnp.dot(xn, w_ref[...], preferred_element_type=jnp.float32) + bias_ref[...]


def _ln_linear_t_kernel(x_ref, g_ref, b_ref, w_ref, bias_ref, o_ref):
    """out[N, tm] = (LN(x) @ w).T + bias  (channel-major / lane-dense output)."""
    xn = _layernorm_rows(x_ref[...], g_ref[...], b_ref[...])
    y = jnp.dot(xn, w_ref[...], preferred_element_type=jnp.float32)   # [tm, N]
    o_ref[...] = y.T + bias_ref[...]                                   # [N, tm]


def _transition_kernel(x_ref, g_ref, b_ref, w1_ref, b1_ref, w2_ref, b2_ref, o_ref):
    """Fused LN + Linear + ReLU + Linear + residual; hidden stays in VMEM."""
    x = x_ref[...]
    xn = _layernorm_rows(x, g_ref[...], b_ref[...])
    h = jnp.dot(xn, w1_ref[...], preferred_element_type=jnp.float32) + b1_ref[...]
    h = jnp.maximum(h, 0.0)
    o_ref[...] = x + jnp.dot(h, w2_ref[...], preferred_element_type=jnp.float32) + b2_ref[...]


def ln_linear(x2, gamma, beta, w, bias=None):
    """LN(x2) @ w + bias, x2 [M, K], tiled over M ('parallel')."""
    M, K = x2.shape
    N = w.shape[1]
    if bias is None:
        bias = jnp.zeros((N,), jnp.float32)
    tm = _pick_tile(M, 512, 8)
    return pl.pallas_call(
        _ln_linear_kernel,
        out_shape=jax.ShapeDtypeStruct((M, N), jnp.float32),
        grid=(M // tm,),
        in_specs=[
            pl.BlockSpec((tm, K), lambda i: (i, 0)),
            pl.BlockSpec((1, K), lambda i: (0, 0)),
            pl.BlockSpec((1, K), lambda i: (0, 0)),
            pl.BlockSpec((K, N), lambda i: (0, 0)),
            pl.BlockSpec((1, N), lambda i: (0, 0)),
        ],
        out_specs=pl.BlockSpec((tm, N), lambda i: (i, 0)),
        compiler_params=pltpu.CompilerParams(dimension_semantics=("parallel",)),
    )(x2, gamma.reshape(1, K), beta.reshape(1, K), w, bias.reshape(1, N))


def ln_linear_t(x2, gamma, beta, w, bias=None):
    """(LN(x2) @ w).T + bias -> [N, M] (channel-major), tiled over M."""
    M, K = x2.shape
    N = w.shape[1]
    if bias is None:
        bias = jnp.zeros((N,), jnp.float32)
    tm = _pick_tile(M, 512, 128)
    return pl.pallas_call(
        _ln_linear_t_kernel,
        out_shape=jax.ShapeDtypeStruct((N, M), jnp.float32),
        grid=(M // tm,),
        in_specs=[
            pl.BlockSpec((tm, K), lambda i: (i, 0)),
            pl.BlockSpec((1, K), lambda i: (0, 0)),
            pl.BlockSpec((1, K), lambda i: (0, 0)),
            pl.BlockSpec((K, N), lambda i: (0, 0)),
            pl.BlockSpec((N, 1), lambda i: (0, 0)),
        ],
        out_specs=pl.BlockSpec((N, tm), lambda i: (0, i)),
        compiler_params=pltpu.CompilerParams(dimension_semantics=("parallel",)),
    )(x2, gamma.reshape(1, K), beta.reshape(1, K), w, bias.reshape(N, 1))


def transition(x, p):
    shape = x.shape
    d = shape[-1]
    x2 = x.reshape(-1, d)
    M = x2.shape[0]
    nd = p["w1"].shape[1]
    tm = _pick_tile(M, 256, 8)
    out = pl.pallas_call(
        _transition_kernel,
        out_shape=jax.ShapeDtypeStruct((M, d), jnp.float32),
        grid=(M // tm,),
        in_specs=[
            pl.BlockSpec((tm, d), lambda i: (i, 0)),
            pl.BlockSpec((1, d), lambda i: (0, 0)),
            pl.BlockSpec((1, d), lambda i: (0, 0)),
            pl.BlockSpec((d, nd), lambda i: (0, 0)),
            pl.BlockSpec((1, nd), lambda i: (0, 0)),
            pl.BlockSpec((nd, d), lambda i: (0, 0)),
            pl.BlockSpec((1, d), lambda i: (0, 0)),
        ],
        out_specs=pl.BlockSpec((tm, d), lambda i: (i, 0)),
        compiler_params=pltpu.CompilerParams(dimension_semantics=("parallel",)),
    )(x2, p["ln_g"].reshape(1, d), p["ln_b"].reshape(1, d),
      p["w1"], p["b1"].reshape(1, nd), p["w2"], p["b2"].reshape(1, d))
    return out.reshape(shape)


# ----------------------------------------------------------------------------
# flash self-attention with pair bias (head-batched, gating + wo + residual fused)
# ----------------------------------------------------------------------------

def _flash_attn_kernel(qg_ref, kv_ref, mk_ref, pb_ref, res_ref, wo_ref, ob_ref,
                       o_ref, m_sc, l_sc, acc_sc, *, H, C, tk):
    HC = H * C
    ki = pl.program_id(2)
    nk = pl.num_programs(2)

    @pl.when(ki == 0)
    def _():
        m_sc[...] = jnp.full_like(m_sc, -1e30)
        l_sc[...] = jnp.zeros_like(l_sc)
        acc_sc[...] = jnp.zeros_like(acc_sc)

    qg = qg_ref[0]                                   # [tq, 2HC]  = [q | g]
    kv = kv_ref[0]                                   # [tk, 2HC]  = [k | v]

    # head-major stacks (lane slices + leading-axis concat)
    q3 = jnp.stack([qg[:, h * C:(h + 1) * C] for h in range(H)], axis=0)        # [H,tq,C]
    k3 = jnp.stack([kv[:, h * C:(h + 1) * C] for h in range(H)], axis=0)        # [H,tk,C]
    v3 = jnp.stack([kv[:, HC + h * C:HC + (h + 1) * C] for h in range(H)], axis=0)

    kbias = INF * (mk_ref[...] - 1.0)                # [1, tk]
    k_start = pl.multiple_of(ki * tk, tk)
    pb = pb_ref[:, :, pl.ds(k_start, tk)]            # [H, tq, tk] from the row slab

    logits = lax.dot_general(q3, k3, (((2,), (2,)), ((0,), (0,))),
                             preferred_element_type=jnp.float32)                 # [H,tq,tk]
    logits = logits + pb + kbias[None]

    m_prev = m_sc[...]                                                           # [H,tq,1]
    m_new = jnp.maximum(m_prev, jnp.max(logits, axis=-1, keepdims=True))
    alpha = jnp.exp(m_prev - m_new)
    p = jnp.exp(logits - m_new)
    l_sc[...] = alpha * l_sc[...] + jnp.sum(p, axis=-1, keepdims=True)
    acc_sc[...] = alpha * acc_sc[...] + lax.dot_general(
        p, v3, (((2,), (1,)), ((0,), (0,))), preferred_element_type=jnp.float32)
    m_sc[...] = m_new

    @pl.when(ki == nk - 1)
    def _():
        gate = _sigmoid(qg[:, HC:])                                              # [tq, HC]
        heads = [acc_sc[h] / l_sc[h] for h in range(H)]                          # exact norm
        ao = jnp.concatenate(heads, axis=-1) * gate                              # [tq, HC]
        proj = jnp.dot(ao, wo_ref[...], preferred_element_type=jnp.float32) + ob_ref[...]
        o_ref[0] = res_ref[0] + proj


def flash_self_attention(qkvg, mask, pair_bias, residual, wo, out_bias, H, C):
    """qkvg [B, L, 4HC] (= [q|g|k|v] fused projection), mask [B, L],
    pair_bias [H, L, L], residual [B, L, d_out].  Returns residual + attn@wo + bias."""
    B, L, _ = qkvg.shape
    HC = H * C
    d_out = wo.shape[1]
    tq = _pick_tile(L, 128, 8)
    tk = _pick_tile(L, 128, 128)
    kernel = functools.partial(_flash_attn_kernel, H=H, C=C, tk=tk)
    # Grid (qi, b, ki): the pair-bias row slab (H, tq, L) is fetched once per qi
    # and reused across all B sequences / kv steps (no per-sequence re-streaming).
    return pl.pallas_call(
        kernel,
        out_shape=jax.ShapeDtypeStruct((B, L, d_out), jnp.float32),
        grid=(L // tq, B, L // tk),
        in_specs=[
            pl.BlockSpec((1, tq, 2 * HC), lambda qi, b, ki: (b, qi, 0)),   # [q | g]
            pl.BlockSpec((1, tk, 2 * HC), lambda qi, b, ki: (b, ki, 1)),   # [k | v]
            pl.BlockSpec((1, tk), lambda qi, b, ki: (b, ki)),              # key mask
            pl.BlockSpec((H, tq, L), lambda qi, b, ki: (0, qi, 0)),        # pair-bias slab
            pl.BlockSpec((1, tq, d_out), lambda qi, b, ki: (b, qi, 0)),    # residual
            pl.BlockSpec((HC, d_out), lambda qi, b, ki: (0, 0)),           # wo
            pl.BlockSpec((1, d_out), lambda qi, b, ki: (0, 0)),            # out bias
        ],
        out_specs=pl.BlockSpec((1, tq, d_out), lambda qi, b, ki: (b, qi, 0)),
        scratch_shapes=[
            pltpu.VMEM((H, tq, 1), jnp.float32),
            pltpu.VMEM((H, tq, 1), jnp.float32),
            pltpu.VMEM((H, tq, C), jnp.float32),
        ],
        compiler_params=pltpu.CompilerParams(
            dimension_semantics=("parallel", "parallel", "arbitrary")),
    )(qkvg, qkvg, mask, pair_bias, residual, wo, out_bias.reshape(1, d_out))


# ----------------------------------------------------------------------------
# column global attention (vectorized over a tile of residue columns)
# ----------------------------------------------------------------------------

def _col_global_attn_kernel(f_ref, mk_ref, res_ref, wo_ref, bo_ref, o_ref, *, H, C):
    HC = H * C
    f = f_ref[...]                           # [tr, S, 2HC+2C] = [q | g | k | v]
    mv = mk_ref[...]                         # [tr, S]
    tr, S = mv.shape

    fq = f[:, :, :HC]                        # [tr, S, HC]
    gate = _sigmoid(f[:, :, HC:2 * HC])      # [tr, S, HC]
    k = f[:, :, 2 * HC:2 * HC + C]           # [tr, S, C]
    v = f[:, :, 2 * HC + C:2 * HC + 2 * C]   # [tr, S, C]

    # masked-mean query for all tr columns at once
    qsum = jnp.sum(fq * mv[:, :, None], axis=1)                 # [tr, HC]
    denom = jnp.sum(mv, axis=-1, keepdims=True) + 1e-10         # [tr, 1]
    q = qsum / denom
    q3 = jnp.stack([q[:, h * C:(h + 1) * C] for h in range(H)], axis=1)   # [tr, H, C]

    logits = lax.dot_general(q3, k, (((2,), (2,)), ((0,), (0,))),
                             preferred_element_type=jnp.float32)           # [tr, H, S]
    logits = logits + (INF * (mv - 1.0))[:, None, :]
    mx = jnp.max(logits, axis=-1, keepdims=True)
    p = jnp.exp(logits - mx)
    p = p / jnp.sum(p, axis=-1, keepdims=True)
    o = lax.dot_general(p, v, (((2,), (1,)), ((0,), (0,))),
                        preferred_element_type=jnp.float32)                # [tr, H, C]

    oh = o.reshape(tr, 1, HC)                                              # broadcast over S
    go = gate * oh                                                         # [tr, S, HC]
    proj = jnp.dot(go.reshape(tr * S, HC), wo_ref[...],
                   preferred_element_type=jnp.float32) + bo_ref[...]
    o_ref[...] = res_ref[...] + proj.reshape(tr, S, wo_ref.shape[1])


def msa_column_global_attention(m, msa_mask, p):
    S, R, c_m = m.shape
    H, C = p["n_head"], p["c"]
    HC = H * C
    m_t = m.transpose(1, 0, 2)            # [R, S, c_m]
    mask_t = msa_mask.T                   # [R, S]
    wcat = jnp.concatenate([p["wq"] * (C ** -0.5), p["wg"], p["wk"], p["wv"]], axis=1)
    bcat = jnp.concatenate([jnp.zeros((HC,), jnp.float32), p["g_bias"],
                            jnp.zeros((2 * C,), jnp.float32)])
    F = 2 * HC + 2 * C
    fused = ln_linear(m_t.reshape(R * S, c_m), p["ln_g"], p["ln_b"],
                      wcat, bcat).reshape(R, S, F)
    tr = _pick_tile(R, 64, 8)
    kernel = functools.partial(_col_global_attn_kernel, H=H, C=C)
    out_t = pl.pallas_call(
        kernel,
        out_shape=jax.ShapeDtypeStruct((R, S, c_m), jnp.float32),
        grid=(R // tr,),
        in_specs=[
            pl.BlockSpec((tr, S, F), lambda i: (i, 0, 0)),
            pl.BlockSpec((tr, S), lambda i: (i, 0)),
            pl.BlockSpec((tr, S, c_m), lambda i: (i, 0, 0)),
            pl.BlockSpec((HC, c_m), lambda i: (0, 0)),
            pl.BlockSpec((1, c_m), lambda i: (0, 0)),
        ],
        out_specs=pl.BlockSpec((tr, S, c_m), lambda i: (i, 0, 0)),
        compiler_params=pltpu.CompilerParams(dimension_semantics=("parallel",)),
    )(fused, mask_t, m_t, p["wo"], p["bo"].reshape(1, c_m))
    return out_t.transpose(1, 0, 2)       # back to [S, R, c_m]


# ----------------------------------------------------------------------------
# outer-product-mean (fused masked LN projections, big-matmul tile kernel)
# ----------------------------------------------------------------------------

def _opm_ab_kernel(x_ref, g_ref, b_ref, w_ref, bias_ref, m_ref, a_ref, b_out_ref, *, D):
    """Fused LN + [wa|wb] projection + msa-mask multiply; a is emitted channel-major."""
    xn = _layernorm_rows(x_ref[...], g_ref[...], b_ref[...])
    y = (jnp.dot(xn, w_ref[...], preferred_element_type=jnp.float32)
         + bias_ref[...]) * m_ref[...]
    a_ref[...] = y[:, :D].T              # [D, tm]
    b_out_ref[...] = y[:, D:]            # [tm, D]


def _opm_kernel(a_ref, b_ref, inv_ref, w_ref, bo_ref, z_ref, o_ref, *, D):
    """Tile (ti, tj): one (d,i)xS @ Sx(j,e) matmul, one batched (d,e)->cz contraction,
    one lane-contiguous store.  The [R,R,D*D] tensor is never materialized."""
    _, ti, S = a_ref.shape
    tj = b_ref.shape[1] // D
    cz = w_ref.shape[2]
    A2 = a_ref[...].reshape(D * ti, S)                                # rows (d, i)
    K = jnp.dot(A2, b_ref[...], preferred_element_type=jnp.float32)   # [(d,i), (j,e)]
    K3 = K.reshape(D, ti * tj, D)                                     # [d, (i,j), e]
    contrib = lax.dot_general(K3, w_ref[...], (((2,), (1,)), ((0,), (0,))),
                              preferred_element_type=jnp.float32)      # [d, (i,j), cz]
    out = jnp.sum(contrib, axis=0).reshape(ti, tj, cz)
    o_ref[...] = z_ref[...] + (out + bo_ref[...]) * inv_ref[...]


def out_product_mean(m, msa_mask, z, p):
    S, R, c_m = m.shape
    D = p["wa"].shape[1]
    cz = z.shape[-1]
    M = S * R
    wab = jnp.concatenate([p["wa"], p["wb"]], axis=1)
    bab = jnp.concatenate([p["ba"], p["bb"]]).reshape(1, 2 * D)
    tm = _pick_tile(M, 512, 128)
    A, Bm = pl.pallas_call(
        functools.partial(_opm_ab_kernel, D=D),
        out_shape=(jax.ShapeDtypeStruct((D, M), jnp.float32),
                   jax.ShapeDtypeStruct((M, D), jnp.float32)),
        grid=(M // tm,),
        in_specs=[
            pl.BlockSpec((tm, c_m), lambda i: (i, 0)),
            pl.BlockSpec((1, c_m), lambda i: (0, 0)),
            pl.BlockSpec((1, c_m), lambda i: (0, 0)),
            pl.BlockSpec((c_m, 2 * D), lambda i: (0, 0)),
            pl.BlockSpec((1, 2 * D), lambda i: (0, 0)),
            pl.BlockSpec((tm, 1), lambda i: (i, 0)),
        ],
        out_specs=(pl.BlockSpec((D, tm), lambda i: (0, i)),
                   pl.BlockSpec((tm, D), lambda i: (i, 0))),
        compiler_params=pltpu.CompilerParams(dimension_semantics=("parallel",)),
    )(m.reshape(M, c_m), p["ln_g"].reshape(1, c_m), p["ln_b"].reshape(1, c_m),
      wab, bab, msa_mask.reshape(M, 1))

    A = A.reshape(D, S, R).transpose(0, 2, 1)      # [D, R, S]   (small layout pass)
    B2 = Bm.reshape(S, R * D)                      # [S, (r, e)] (free metadata reshape)
    Wst = p["wo"].reshape(D, D, cz)
    norm = jnp.dot(msa_mask.T, msa_mask)           # [R, R]
    inv = (1.0 / (1e-3 + norm)).reshape(R, R, 1)

    ti = _pick_tile(R, 32, 8)
    tj = _pick_tile(R, 32, 8)
    return pl.pallas_call(
        functools.partial(_opm_kernel, D=D),
        out_shape=jax.ShapeDtypeStruct((R, R, cz), jnp.float32),
        grid=(R // ti, R // tj),
        in_specs=[
            pl.BlockSpec((D, ti, S), lambda i, j: (0, i, 0)),
            pl.BlockSpec((S, tj * D), lambda i, j: (0, j)),
            pl.BlockSpec((ti, tj, 1), lambda i, j: (i, j, 0)),
            pl.BlockSpec((D, D, cz), lambda i, j: (0, 0, 0)),
            pl.BlockSpec((1, cz), lambda i, j: (0, 0)),
            pl.BlockSpec((ti, tj, cz), lambda i, j: (i, j, 0)),
        ],
        out_specs=pl.BlockSpec((ti, tj, cz), lambda i, j: (i, j, 0)),
        compiler_params=pltpu.CompilerParams(
            dimension_semantics=("parallel", "parallel")),
    )(A, B2, inv, Wst, p["bo"].reshape(1, cz), z)


# ----------------------------------------------------------------------------
# triangle multiplication (fused projections / epilogue, tiled batched matmul)
# ----------------------------------------------------------------------------

def _tri_proj_kernel(z_ref, lg_ref, lb_ref, w_ref, bias_ref, mask_ref,
                     a_out_ref, b_out_ref, *, c):
    """LN + 4-way projection, then a = mask*ap*sigmoid(ag), b = mask*bp*sigmoid(bg),
    both emitted channel-major [c, tm]."""
    zn = _layernorm_rows(z_ref[...], lg_ref[...], lb_ref[...])
    y = jnp.dot(zn, w_ref[...], preferred_element_type=jnp.float32).T + bias_ref[...]  # [4c, tm]
    mk = mask_ref[...]                                  # [1, tm]
    a_out_ref[...] = mk * y[:c] * _sigmoid(y[2 * c:3 * c])
    b_out_ref[...] = mk * y[c:2 * c] * _sigmoid(y[3 * c:4 * c])


def _tri_mm_out_kernel(a_ref, b_ref, o_ref):
    """outgoing: x[c,i,j] = sum_k a[c,i,k]*b[c,j,k] (accumulated over the k grid axis)."""
    @pl.when(pl.program_id(2) == 0)
    def _():
        o_ref[...] = jnp.zeros_like(o_ref)
    o_ref[...] += lax.dot_general(a_ref[...], b_ref[...],
                                  (((2,), (2,)), ((0,), (0,))),
                                  preferred_element_type=jnp.float32)


def _tri_mm_in_kernel(a_ref, b_ref, o_ref):
    """incoming: a block is [c, tk, ti]; x[c,i,j] = sum_k a[c,k,i]*b[c,k,j].
    a is re-oriented in VMEM (no HBM transpose pass)."""
    @pl.when(pl.program_id(2) == 0)
    def _():
        o_ref[...] = jnp.zeros_like(o_ref)
    at = jnp.swapaxes(a_ref[...], 1, 2)                 # [c, ti, tk]
    o_ref[...] += lax.dot_general(at, b_ref[...],
                                  (((2,), (1,)), ((0,), (0,))),
                                  preferred_element_type=jnp.float32)


def _tri_final_kernel(ab_ref, lng_ref, lnb_ref, wz_ref, ob_ref,
                      z_ref, zg_ref, zb_ref, wg_ref, bg_ref, o_ref):
    """channel-LN(ab) @ wz + out_bias, gate = sigmoid(LN(z) @ wg + bg),
    out = z + gate * proj  — all fused in one pass."""
    x = ab_ref[...]                                     # [c, tm] channel-major
    mu = jnp.mean(x, axis=0, keepdims=True)
    xc = x - mu
    var = jnp.mean(xc * xc, axis=0, keepdims=True)
    xn = xc * lax.rsqrt(var + LN_EPS) * lng_ref[...] + lnb_ref[...]
    proj = jnp.dot(xn.T, wz_ref[...], preferred_element_type=jnp.float32) + ob_ref[...]
    zt = z_ref[...]
    zn = _layernorm_rows(zt, zg_ref[...], zb_ref[...])
    gate = _sigmoid(jnp.dot(zn, wg_ref[...], preferred_element_type=jnp.float32) + bg_ref[...])
    o_ref[...] = zt + gate * proj


def triangle_multiplication(z, pair_mask, p, outgoing):
    R, _, cz = z.shape
    c = p["wap"].shape[1]
    M = R * R
    z2 = z.reshape(M, cz)
    wcat = jnp.concatenate([p["wap"], p["wbp"], p["wag"], p["wbg"]], axis=1)
    bcat = jnp.concatenate([p["bap"], p["bbp"], p["bag"], p["bbg"]]).reshape(4 * c, 1)
    tm = _pick_tile(M, 512, 128)

    aT, bT = pl.pallas_call(
        functools.partial(_tri_proj_kernel, c=c),
        out_shape=(jax.ShapeDtypeStruct((c, M), jnp.float32),
                   jax.ShapeDtypeStruct((c, M), jnp.float32)),
        grid=(M // tm,),
        in_specs=[
            pl.BlockSpec((tm, cz), lambda i: (i, 0)),
            pl.BlockSpec((1, cz), lambda i: (0, 0)),
            pl.BlockSpec((1, cz), lambda i: (0, 0)),
            pl.BlockSpec((cz, 4 * c), lambda i: (0, 0)),
            pl.BlockSpec((4 * c, 1), lambda i: (0, 0)),
            pl.BlockSpec((1, tm), lambda i: (0, i)),
        ],
        out_specs=(pl.BlockSpec((c, tm), lambda i: (0, i)),
                   pl.BlockSpec((c, tm), lambda i: (0, i))),
        compiler_params=pltpu.CompilerParams(dimension_semantics=("parallel",)),
    )(z2, p["ln_g"].reshape(1, cz), p["ln_b"].reshape(1, cz), wcat, bcat,
      pair_mask.reshape(1, M))
    aT = aT.reshape(c, R, R)
    bT = bT.reshape(c, R, R)

    ti = _pick_tile(R, 128, 128)
    tj = _pick_tile(R, 128, 128)
    tk = _pick_tile(R, 128, 128)
    if outgoing:
        kernel = _tri_mm_out_kernel
        a_spec = pl.BlockSpec((c, ti, tk), lambda i, j, k: (0, i, k))
        b_spec = pl.BlockSpec((c, tj, tk), lambda i, j, k: (0, j, k))
    else:
        kernel = _tri_mm_in_kernel
        a_spec = pl.BlockSpec((c, tk, ti), lambda i, j, k: (0, k, i))
        b_spec = pl.BlockSpec((c, tk, tj), lambda i, j, k: (0, k, j))
    abT = pl.pallas_call(
        kernel,
        out_shape=jax.ShapeDtypeStruct((c, R, R), jnp.float32),
        grid=(R // ti, R // tj, R // tk),
        in_specs=[a_spec, b_spec],
        out_specs=pl.BlockSpec((c, ti, tj), lambda i, j, k: (0, i, j)),
        compiler_params=pltpu.CompilerParams(
            dimension_semantics=("parallel", "parallel", "arbitrary")),
    )(aT, bT)

    out = pl.pallas_call(
        _tri_final_kernel,
        out_shape=jax.ShapeDtypeStruct((M, cz), jnp.float32),
        grid=(M // tm,),
        in_specs=[
            pl.BlockSpec((c, tm), lambda i: (0, i)),
            pl.BlockSpec((c, 1), lambda i: (0, 0)),
            pl.BlockSpec((c, 1), lambda i: (0, 0)),
            pl.BlockSpec((c, cz), lambda i: (0, 0)),
            pl.BlockSpec((1, cz), lambda i: (0, 0)),
            pl.BlockSpec((tm, cz), lambda i: (i, 0)),
            pl.BlockSpec((1, cz), lambda i: (0, 0)),
            pl.BlockSpec((1, cz), lambda i: (0, 0)),
            pl.BlockSpec((cz, cz), lambda i: (0, 0)),
            pl.BlockSpec((1, cz), lambda i: (0, 0)),
        ],
        out_specs=pl.BlockSpec((tm, cz), lambda i: (i, 0)),
        compiler_params=pltpu.CompilerParams(dimension_semantics=("parallel",)),
    )(abT.reshape(c, M), p["ln_out_g"].reshape(c, 1), p["ln_out_b"].reshape(c, 1),
      p["wz"], p["out_bias"].reshape(1, cz),
      z2, p["ln_g"].reshape(1, cz), p["ln_b"].reshape(1, cz),
      p["wg"], p["bg"].reshape(1, cz))
    return out.reshape(R, R, cz)


# ----------------------------------------------------------------------------
# module forwards
# ----------------------------------------------------------------------------

def msa_row_attention_with_pair_bias(m, z, msa_mask, p):
    S, R, c_m = m.shape
    a = p["attn"]
    H, C = a["n_head"], a["c"]
    HC = H * C
    pb = ln_linear_t(z.reshape(R * R, z.shape[-1]), p["ln_z_g"], p["ln_z_b"],
                     p["pair_bias_w"]).reshape(H, R, R)
    wcat = jnp.concatenate([a["wq"] * (C ** -0.5), a["wg"], a["wk"], a["wv"]], axis=1)
    bcat = jnp.concatenate([jnp.zeros((HC,), jnp.float32), a["g_bias"],
                            jnp.zeros((2 * HC,), jnp.float32)])
    qkvg = ln_linear(m.reshape(S * R, c_m), p["ln_m_g"], p["ln_m_b"],
                     wcat, bcat).reshape(S, R, 4 * HC)
    return flash_self_attention(qkvg, msa_mask, pb, m, a["wo"], a["out_bias"], H, C)


def triangle_attention(z, pair_mask, p, starting):
    # TODO(synk): ending-node path still transposes z / out in XLA; swapped flash
    # BlockSpec index maps would remove these two HBM passes over [R,R,c_z].
    if not starting:
        z = z.transpose(1, 0, 2)
        pair_mask = pair_mask.T
    R, _, cz = z.shape
    a = p["attn"]
    H, C = a["n_head"], a["c"]
    HC = H * C
    pb = ln_linear_t(z.reshape(R * R, cz), p["ln_g"], p["ln_b"],
                     p["pair_bias_w"]).reshape(H, R, R)
    wcat = jnp.concatenate([a["wq"] * (C ** -0.5), a["wg"], a["wk"], a["wv"]], axis=1)
    bcat = jnp.concatenate([jnp.zeros((HC,), jnp.float32), a["g_bias"],
                            jnp.zeros((2 * HC,), jnp.float32)])
    qkvg = ln_linear(z.reshape(R * R, cz), p["ln_g"], p["ln_b"],
                     wcat, bcat).reshape(R, R, 4 * HC)
    out = flash_self_attention(qkvg, pair_mask, pb, z, a["wo"], a["out_bias"], H, C)
    if not starting:
        out = out.transpose(1, 0, 2)
    return out


def pair_stack(z, pair_mask, p):
    z = triangle_multiplication(z, pair_mask, p["tri_out"], outgoing=True)
    z = triangle_multiplication(z, pair_mask, p["tri_in"], outgoing=False)
    z = triangle_attention(z, pair_mask, p["tri_att_start"], starting=True)
    z = triangle_attention(z, pair_mask, p["tri_att_end"], starting=False)
    z = transition(z, p["pair_trans"])
    return z


def extra_msa_core(m, z, msa_mask, p):
    m = msa_row_attention_with_pair_bias(m, z, msa_mask, p["row_attn"])
    m = msa_column_global_attention(m, msa_mask, p["col_attn"])
    m = transition(m, p["msa_trans"])
    return m


def extra_msa_block(m, z, msa_mask, pair_mask, p, first_block, last_block):
    # dap_size == 1 => padding_size == 1; scatter/gather/All_to_All are identity.
    pad = 1
    if first_block:
        m = jnp.pad(m, ((0, 0), (0, pad), (0, 0)))
        z = jnp.pad(z, ((0, pad), (0, pad), (0, 0)))
    mm = jnp.pad(msa_mask, ((0, 0), (0, pad)))
    pm = jnp.pad(pair_mask, ((0, pad), (0, pad)))

    m = extra_msa_core(m, z, mm, p["msa"])
    z = out_product_mean(m, mm, z, p["opm"])
    # All_to_All(m, 1, 2) is identity at world_size == 1.
    z = pair_stack(z, pm, p["pair"])

    if last_block:
        m = m[:, :-pad, :]
        z = z[:-pad, :-pad, :]
    return m, z


def extra_msa_stack(m, z, msa_mask, pair_mask, params):
    nb = len(params["blocks"])
    for bi, bp in enumerate(params["blocks"]):
        m, z = extra_msa_block(m, z, msa_mask, pair_mask, bp,
                               first_block=(bi == 0), last_block=(bi == nb - 1))
    return z  # ExtraMSAStack.forward returns only z


# ----------------------------------------------------------------------------
# Deterministic parameter init (shapes from the module's __init__)
# ----------------------------------------------------------------------------

def init_params(key, c_m, c_z, no_blocks,
                msa_attn_c=8, msa_attn_h=8, glob_c=8, glob_h=8,
                opm_proj=32, tri_attn_c=32, tri_attn_h=4, trans_n=4):
    keys = iter(jax.random.split(key, no_blocks * 256))

    def w(i, o):
        return 0.02 * jax.random.normal(next(keys), (i, o), jnp.float32)

    def zeros(n):
        return jnp.zeros((n,), jnp.float32)

    def ones(n):
        return jnp.ones((n,), jnp.float32)

    def attn_params(d_in, c, h, d_out):
        return dict(n_head=h, c=c,
                    wq=w(d_in, h * c), wk=w(d_in, h * c), wv=w(d_in, h * c),
                    wg=w(d_in, h * c), g_bias=ones(h * c),
                    wo=w(h * c, d_out), out_bias=zeros(d_out))

    def tri_mult_params(d_pair, c):
        return dict(ln_g=ones(d_pair), ln_b=zeros(d_pair),
                    wap=w(d_pair, c), bap=zeros(c), wag=w(d_pair, c), bag=zeros(c),
                    wbp=w(d_pair, c), bbp=zeros(c), wbg=w(d_pair, c), bbg=zeros(c),
                    ln_out_g=ones(c), ln_out_b=zeros(c),
                    wz=w(c, d_pair), out_bias=zeros(d_pair),
                    wg=w(d_pair, d_pair), bg=zeros(d_pair))

    def tri_attn_params(d_pair, c, h):
        return dict(ln_g=ones(d_pair), ln_b=zeros(d_pair),
                    pair_bias_w=w(d_pair, h),
                    attn=attn_params(d_pair, c, h, d_pair))

    def transition_params(d, n):
        return dict(ln_g=ones(d), ln_b=zeros(d),
                    w1=w(d, n * d), b1=zeros(n * d),
                    w2=w(n * d, d), b2=zeros(d))

    blocks = []
    for _ in range(no_blocks):
        blocks.append(dict(
            msa=dict(
                row_attn=dict(ln_m_g=ones(c_m), ln_m_b=zeros(c_m),
                              ln_z_g=ones(c_z), ln_z_b=zeros(c_z),
                              pair_bias_w=w(c_z, msa_attn_h),
                              attn=attn_params(c_m, msa_attn_c, msa_attn_h, c_m)),
                col_attn=dict(ln_g=ones(c_m), ln_b=zeros(c_m),
                              n_head=glob_h, c=glob_c,
                              wq=w(c_m, glob_h * glob_c),
                              wk=w(c_m, glob_c), wv=w(c_m, glob_c),
                              wg=w(c_m, glob_h * glob_c), g_bias=ones(glob_h * glob_c),
                              wo=w(glob_h * glob_c, c_m), bo=zeros(c_m)),
                msa_trans=transition_params(c_m, trans_n)),
            opm=dict(ln_g=ones(c_m), ln_b=zeros(c_m),
                     wa=w(c_m, opm_proj), ba=zeros(opm_proj),
                     wb=w(c_m, opm_proj), bb=zeros(opm_proj),
                     wo=w(opm_proj * opm_proj, c_z), bo=zeros(c_z)),
            pair=dict(tri_out=tri_mult_params(c_z, c_z),
                      tri_in=tri_mult_params(c_z, c_z),
                      tri_att_start=tri_attn_params(c_z, tri_attn_c, tri_attn_h),
                      tri_att_end=tri_attn_params(c_z, tri_attn_c, tri_attn_h),
                      pair_trans=transition_params(c_z, trans_n)),
        ))
    return dict(blocks=blocks)


# ----------------------------------------------------------------------------

if __name__ == "__main__":
    S, R = 8, 15          # extra-MSA sequences, residues (padded to 16 inside blocks)
    C_M, C_Z = 16, 16
    NO_BLOCKS = 2

    key = jax.random.PRNGKey(0)
    k_m, k_z, k_mm, k_pm, k_p = jax.random.split(key, 5)
    m = jax.random.normal(k_m, (S, R, C_M), jnp.float32)
    z = jax.random.normal(k_z, (R, R, C_Z), jnp.float32)
    msa_mask = (jax.random.uniform(k_mm, (S, R)) > 0.1).astype(jnp.float32)
    pair_mask = (jax.random.uniform(k_pm, (R, R)) > 0.1).astype(jnp.float32)

    params = init_params(k_p, C_M, C_Z, NO_BLOCKS)

    z_out = extra_msa_stack(m, z, msa_mask, pair_mask, params)
    z_out = jax.block_until_ready(z_out)

    assert z_out.shape == (R, R, C_Z), z_out.shape
    assert bool(jnp.all(jnp.isfinite(z_out)))
    print("KERNEL_OK")
</pallas_src>

<mosaic_0001>
module attributes {stable_mosaic.version = 11 : i64} {
  func.func @_ln_linear_t_kernel(%arg0: i32, %arg1: memref<256x16xf32, #tpu.memory_space<vmem>>, %arg2: memref<1x16xf32, #tpu.memory_space<vmem>>, %arg3: memref<1x16xf32, #tpu.memory_space<vmem>>, %arg4: memref<16x8xf32, #tpu.memory_space<vmem>>, %arg5: memref<8x1xf32, #tpu.memory_space<vmem>>, %arg6: memref<8x256xf32, #tpu.memory_space<vmem>>) attributes {dimension_semantics = [#tpu.dimension_semantics<parallel>], iteration_bounds = array<i64: 1>, scalar_prefetch = 0 : i64, scratch_operands = 0 : i64, tpu.core_type = #tpu.core_type<tc>, window_params = [{transform_indices = @transform_0, window_bounds = array<i64: 256, 16>}, {pipeline_mode = #tpu.pipeline_mode<synchronous>, transform_indices = @transform_1, window_bounds = array<i64: 1, 16>}, {pipeline_mode = #tpu.pipeline_mode<synchronous>, transform_indices = @transform_2, window_bounds = array<i64: 1, 16>}, {pipeline_mode = #tpu.pipeline_mode<synchronous>, transform_indices = @transform_3, window_bounds = array<i64: 16, 8>}, {pipeline_mode = #tpu.pipeline_mode<synchronous>, transform_indices = @transform_4, window_bounds = array<i64: 8, 1>}, {transform_indices = @transform_5, window_bounds = array<i64: 8, 256>}]} {
    %c0 = arith.constant 0 : index
    %c0_0 = arith.constant 0 : index
    %0 = vector.load %arg1[%c0, %c0_0] : memref<256x16xf32, #tpu.memory_space<vmem>>, vector<256x16xf32>
    %c0_1 = arith.constant 0 : index
    %c0_2 = arith.constant 0 : index
    %1 = vector.load %arg2[%c0_1, %c0_2] : memref<1x16xf32, #tpu.memory_space<vmem>>, vector<1x16xf32>
    %c0_3 = arith.constant 0 : index
    %c0_4 = arith.constant 0 : index
    %2 = vector.load %arg3[%c0_3, %c0_4] : memref<1x16xf32, #tpu.memory_space<vmem>>, vector<1x16xf32>
    %cst = arith.constant dense<0.000000e+00> : vector<256xf32>
    %3 = vector.multi_reduction <add>, %0, %cst [1] : vector<256x16xf32> to vector<256xf32>
    %4 = vector.shape_cast %3 : vector<256xf32> to vector<256x1xf32>
    %cst_5 = arith.constant 1.600000e+01 : f32
    %5 = vector.broadcast %cst_5 : f32 to vector<256x1xf32>
    %6 = arith.divf %4, %5 : vector<256x1xf32>
    %7 = vector.broadcast %6 : vector<256x1xf32> to vector<256x16xf32>
    %8 = arith.subf %0, %7 : vector<256x16xf32>
    %9 = arith.mulf %8, %8 : vector<256x16xf32>
    %cst_6 = arith.constant dense<0.000000e+00> : vector<256xf32>
    %10 = vector.multi_reduction <add>, %9, %cst_6 [1] : vector<256x16xf32> to vector<256xf32>
    %11 = vector.shape_cast %10 : vector<256xf32> to vector<256x1xf32>
    %cst_7 = arith.constant 1.600000e+01 : f32
    %12 = vector.broadcast %cst_7 : f32 to vector<256x1xf32>
    %13 = arith.divf %11, %12 : vector<256x1xf32>
    %cst_8 = arith.constant 9.99999974E-6 : f32
    %14 = vector.broadcast %cst_8 : f32 to vector<256x1xf32>
    %15 = arith.addf %13, %14 : vector<256x1xf32>
    %16 = math.rsqrt %15 : vector<256x1xf32>
    %17 = vector.broadcast %16 : vector<256x1xf32> to vector<256x16xf32>
    %18 = arith.mulf %8, %17 : vector<256x16xf32>
    %19 = vector.broadcast %1 : vector<1x16xf32> to vector<256x16xf32>
    %20 = arith.mulf %18, %19 : vector<256x16xf32>
    %21 = vector.broadcast %2 : vector<1x16xf32> to vector<256x16xf32>
    %22 = arith.addf %20, %21 : vector<256x16xf32>
    %c0_9 = arith.constant 0 : index
    %c0_10 = arith.constant 0 : index
    %23 = vector.load %arg4[%c0_9, %c0_10] : memref<16x8xf32, #tpu.memory_space<vmem>>, vector<16x8xf32>
    %cst_11 = arith.constant dense<0.000000e+00> : vector<256x8xf32>
    %24 = tpu.matmul %22, %23, %cst_11 {dimension_numbers = #tpu.dot_dimension_numbers<[1], [0], [0], [1], [0, 0, 1, 1], [], []>} : vector<256x16xf32>, vector<16x8xf32>, vector<256x8xf32> -> vector<256x8xf32>
    %25 = tpu.transpose %24, [1, 0] : vector<256x8xf32> -> vector<8x256xf32>
    %c0_12 = arith.constant 0 : index
    %c0_13 = arith.constant 0 : index
    %26 = vector.load %arg5[%c0_12, %c0_13] : memref<8x1xf32, #tpu.memory_space<vmem>>, vector<8x1xf32>
    %27 = vector.broadcast %26 : vector<8x1xf32> to vector<8x256xf32>
    %28 = arith.addf %25, %27 : vector<8x256xf32>
    %c0_14 = arith.constant 0 : index
    %c0_15 = arith.constant 0 : index
    %29 = vector.load %arg6[%c0_14, %c0_15] : memref<8x256xf32, #tpu.memory_space<vmem>>, vector<8x256xf32>
    tpu.vector_store %arg6[%c0_14, %c0_15], %28 {strides = array<i32>} : memref<8x256xf32, #tpu.memory_space<vmem>>, vector<8x256xf32>,
    return
  }
  func.func @transform_0(%arg0: i32) -> (i32, i32) {
    %c0_i32 = arith.constant 0 : i32
    %c0_i32_0 = arith.constant 0 : i32
    return %arg0, %c0_i32 : i32, i32
  }
  func.func @transform_1(%arg0: i32) -> (i32, i32) {
    %c0_i32 = arith.constant 0 : i32
    %c0_i32_0 = arith.constant 0 : i32
    %c0_i32_1 = arith.constant 0 : i32
    return %c0_i32, %c0_i32_0 : i32, i32
  }
  func.func @transform_2(%arg0: i32) -> (i32, i32) {
    %c0_i32 = arith.constant 0 : i32
    %c0_i32_0 = arith.constant 0 : i32
    %c0_i32_1 = arith.constant 0 : i32
    return %c0_i32, %c0_i32_0 : i32, i32
  }
  func.func @transform_3(%arg0: i32) -> (i32, i32) {
    %c0_i32 = arith.constant 0 : i32
    %c0_i32_0 = arith.constant 0 : i32
    %c0_i32_1 = arith.constant 0 : i32
    return %c0_i32, %c0_i32_0 : i32, i32
  }
  func.func @transform_4(%arg0: i32) -> (i32, i32) {
    %c0_i32 = arith.constant 0 : i32
    %c0_i32_0 = arith.constant 0 : i32
    %c0_i32_1 = arith.constant 0 : i32
    return %c0_i32, %c0_i32_0 : i32, i32
  }
  func.func @transform_5(%arg0: i32) -> (i32, i32) {
    %c0_i32 = arith.constant 0 : i32
    %c0_i32_0 = arith.constant 0 : i32
    return %c0_i32, %arg0 : i32, i32
  }
}

</mosaic_0001>

<llo_original>
// kernel: tpu_custom_call.1
$region0: #{tpu_custom_call.1}
  #allocation0 [shape = 'u32[]', space=smem, size = 0x4, offset = 0x4, fixed_abs, tag = 'smem constant byte address 0x4 - core index']
  #allocation1 [shape = 'u32[144,128]{1,0:T(1,128)}', space=vmem, size = 0x12000, scoped, tag = 'internal scratch']
  %s0 = inlined_call_operand.vmem [shape: f32[256,16], index: 0, kind: input, shape index: {}]
  %s1 = inlined_call_operand.vmem [shape: f32[1,16], index: 1, kind: input, shape index: {}]
  %s2 = inlined_call_operand.vmem [shape: f32[1,16], index: 2, kind: input, shape index: {}]
  %s3 = inlined_call_operand.vmem [shape: f32[16,8], index: 3, kind: input, shape index: {}]
  %s4 = inlined_call_operand.vmem [shape: f32[8,1], index: 4, kind: input, shape index: {}]
  %s5 = inlined_call_operand.hbm [shape: f32[8,256], index: 5, kind: output, shape index: {}]
  %s6 = sld [smem:[#allocation0]]
  $region30: #{tpu_custom_call.1} parent=0
    _
  %s8 = ssub.s32 1, %s6
  %s9 = scalar_select 0, %s8, %s6
  $region1: #{tpu_custom_call.1} parent=0
    #allocation2 [shape = 'u8[8192]{0}', space=vmem, size = 0x2000, scoped, tag = 'output window, operand 0, single buffered']
    #allocation3 [shape = 's32[1]{0}', space=sflag, size = 0x4, scoped, tag = 'scoped memory for tpu_custom_call.1']
    %10 = vsyncpa [#allocation3], 0
    // Predicated region
    $region2: #{tpu_custom_call.1} parent=1 // pred_check
      _
    $region3: #{tpu_custom_call.1} parent=1 // pred_check_branch
      %12 = sbr.rel (0) target = $region5
    $region4: #{tpu_custom_call.1} parent=1 // pred_region
      _
    $region5: #{tpu_custom_call.1} parent=1 // pred_fallthru
      _
    // Predicated region
    $region6: #{tpu_custom_call.1} parent=1 // pred_check
      _
    $region7: #{tpu_custom_call.1} parent=1 // pred_check_branch
      %14 = sbr.rel (0) target = $region9
    $region8: #{tpu_custom_call.1} parent=1 // pred_region
      _
    $region9: #{tpu_custom_call.1} parent=1 // pred_fallthru
      _
    // Predicated region
    $region10: #{tpu_custom_call.1} parent=1 // pred_check
      _
    $region11: #{tpu_custom_call.1} parent=1 // pred_check_branch
      %16 = sbr.rel (0) target = $region13
    $region12: #{tpu_custom_call.1} parent=1 // pred_region
      _
    $region13: #{tpu_custom_call.1} parent=1 // pred_fallthru
      _
    // Predicated region
    $region14: #{tpu_custom_call.1} parent=1 // pred_check
      _
    $region15: #{tpu_custom_call.1} parent=1 // pred_check_branch
      %18 = sbr.rel (0) target = $region17
    $region16: #{tpu_custom_call.1} parent=1 // pred_region
      _
    $region17: #{tpu_custom_call.1} parent=1 // pred_fallthru
      _
    // Predicated region
    $region18: #{tpu_custom_call.1} parent=1 // pred_check
      _
    $region19: #{tpu_custom_call.1} parent=1 // pred_check_branch
      %20 = sbr.rel (0) target = $region21
    $region20: #{tpu_custom_call.1} parent=1 // pred_region
      _
    $region21: #{tpu_custom_call.1} parent=1 // pred_fallthru
      _
    %v21 = vld [vmem:[%s0] sm:$0xff]
    %v22 = vld [vmem:[%s0 + $0x8] sm:$0xff]
    %v23 = vld [vmem:[%s0 + $0x10] sm:$0xff]
    %v24 = vld [vmem:[%s0 + $0x18] sm:$0xff]
    %v25 = vld [vmem:[%s0 + $0x20] sm:$0xff]
    %v26 = vld [vmem:[%s0 + $0x28] sm:$0xff]
    %v27 = vld [vmem:[%s0 + $0x30] sm:$0xff]
    %v28 = vld [vmem:[%s0 + $0x38] sm:$0xff]
    %v29 = vld [vmem:[%s0 + $0x40] sm:$0xff]
    %v30 = vld [vmem:[%s0 + $0x48] sm:$0xff]
    %v31 = vld [vmem:[%s0 + $0x50] sm:$0xff]
    %v32 = vld [vmem:[%s0 + $0x58] sm:$0xff]
    %v33 = vld [vmem:[%s0 + $0x60] sm:$0xff]
    %v34 = vld [vmem:[%s0 + $0x68] sm:$0xff]
    %v35 = vld [vmem:[%s0 + $0x70] sm:$0xff]
    %v36 = vld [vmem:[%s0 + $0x78] sm:$0xff]
    %v37 = vld [vmem:[%s0 + $0x80] sm:$0xff]
    %v38 = vld [vmem:[%s0 + $0x88] sm:$0xff]
    %v39 = vld [vmem:[%s0 + $0x90] sm:$0xff]
    %v40 = vld [vmem:[%s0 + $0x98] sm:$0xff]
    %v41 = vld [vmem:[%s0 + $0xa0] sm:$0xff]
    %v42 = vld [vmem:[%s0 + $0xa8] sm:$0xff]
    %v43 = vld [vmem:[%s0 + $0xb0] sm:$0xff]
    %v44 = vld [vmem:[%s0 + $0xb8] sm:$0xff]
    %v45 = vld [vmem:[%s0 + $0xc0] sm:$0xff]
    %v46 = vld [vmem:[%s0 + $0xc8] sm:$0xff]
    %v47 = vld [vmem:[%s0 + $0xd0] sm:$0xff]
    %v48 = vld [vmem:[%s0 + $0xd8] sm:$0xff]
    %v49 = vld [vmem:[%s0 + $0xe0] sm:$0xff]
    %v50 = vld [vmem:[%s0 + $0xe8] sm:$0xff]
    %v51 = vld [vmem:[%s0 + $0xf0] sm:$0xff]
    %v52 = vld [vmem:[%s0 + $0xf8] sm:$0xff]
    %v53 = vld [vmem:[%s1] sm:$0x1]
    %v54 = vld [vmem:[%s2] sm:$0x1]
    %vm55 = vcmask 130048
    %v56 = vsel %vm55, %v21, 0.0
    %57 = vadd.xlane.f32.xlu0 %v56
    %v58 = vpop.xlane.xlu0 %57
    %v59 = vsel %vm55, %v22, 0.0
    %60 = vadd.xlane.f32.xlu0 %v59
    %v61 = vpop.xlane.xlu0 %60
    %v62 = vsel %vm55, %v23, 0.0
    %63 = vadd.xlane.f32.xlu0 %v62
    %v64 = vpop.xlane.xlu0 %63
    %v65 = vsel %vm55, %v24, 0.0
    %66 = vadd.xlane.f32.xlu0 %v65
    %v67 = vpop.xlane.xlu0 %66
    %v68 = vsel %vm55, %v25, 0.0
    %69 = vadd.xlane.f32.xlu0 %v68
    %v70 = vpop.xlane.xlu0 %69
    %v71 = vsel %vm55, %v26, 0.0
    %72 = vadd.xlane.f32.xlu0 %v71
    %v73 = vpop.xlane.xlu0 %72
    %v74 = vsel %vm55, %v27, 0.0
    %75 = vadd.xlane.f32.xlu0 %v74
    %v76 = vpop.xlane.xlu0 %75
    %v77 = vsel %vm55, %v28, 0.0
    %78 = vadd.xlane.f32.xlu0 %v77
    %v79 = vpop.xlane.xlu0 %78
    %v80 = vsel %vm55, %v29, 0.0
    %81 = vadd.xlane.f32.xlu0 %v80
    %v82 = vpop.xlane.xlu0 %81
    %v83 = vsel %vm55, %v30, 0.0
    %84 = vadd.xlane.f32.xlu0 %v83
    %v85 = vpop.xlane.xlu0 %84
    %v86 = vsel %vm55, %v31, 0.0
    %87 = vadd.xlane.f32.xlu0 %v86
    %v88 = vpop.xlane.xlu0 %87
    %v89 = vsel %vm55, %v32, 0.0
    %90 = vadd.xlane.f32.xlu0 %v89
    %v91 = vpop.xlane.xlu0 %90
    %v92 = vsel %vm55, %v33, 0.0
    %93 = vadd.xlane.f32.xlu0 %v92
    %v94 = vpop.xlane.xlu0 %93
    %v95 = vsel %vm55, %v34, 0.0
    %96 = vadd.xlane.f32.xlu0 %v95
    %v97 = vpop.xlane.xlu0 %96
    %v98 = vsel %vm55, %v35, 0.0
    %99 = vadd.xlane.f32.xlu0 %v98
    %v100 = vpop.xlane.xlu0 %99
    %v101 = vsel %vm55, %v36, 0.0
    %102 = vadd.xlane.f32.xlu0 %v101
    %v103 = vpop.xlane.xlu0 %102
    %v104 = vsel %vm55, %v37, 0.0
    %105 = vadd.xlane.f32.xlu0 %v104
    %v106 = vpop.xlane.xlu0 %105
    %v107 = vsel %vm55, %v38, 0.0
    %108 = vadd.xlane.f32.xlu0 %v107
    %v109 = vpop.xlane.xlu0 %108
    %v110 = vsel %vm55, %v39, 0.0
    %111 = vadd.xlane.f32.xlu0 %v110
    %v112 = vpop.xlane.xlu0 %111
    %v113 = vsel %vm55, %v40, 0.0
    %114 = vadd.xlane.f32.xlu0 %v113
    %v115 = vpop.xlane.xlu0 %114
    %v116 = vsel %vm55, %v41, 0.0
    %117 = vadd.xlane.f32.xlu0 %v116
    %v118 = vpop.xlane.xlu0 %117
    %v119 = vsel %vm55, %v42, 0.0
    %120 = vadd.xlane.f32.xlu0 %v119
    %v121 = vpop.xlane.xlu0 %120
    %v122 = vsel %vm55, %v43, 0.0
    %123 = vadd.xlane.f32.xlu0 %v122
    %v124 = vpop.xlane.xlu0 %123
    %v125 = vsel %vm55, %v44, 0.0
    %126 = vadd.xlane.f32.xlu0 %v125
    %v127 = vpop.xlane.xlu0 %126
    %v128 = vsel %vm55, %v45, 0.0
    %129 = vadd.xlane.f32.xlu0 %v128
    %v130 = vpop.xlane.xlu0 %129
    %v131 = vsel %vm55, %v46, 0.0
    %132 = vadd.xlane.f32.xlu0 %v131
    %v133 = vpop.xlane.xlu0 %132
    %v134 = vsel %vm55, %v47, 0.0
    %135 = vadd.xlane.f32.xlu0 %v134
    %v136 = vpop.xlane.xlu0 %135
    %v137 = vsel %vm55, %v48, 0.0
    %138 = vadd.xlane.f32.xlu0 %v137
    %v139 = vpop.xlane.xlu0 %138
    %v140 = vsel %vm55, %v49, 0.0
    %141 = vadd.xlane.f32.xlu0 %v140
    %v142 = vpop.xlane.xlu0 %141
    %v143 = vsel %vm55, %v50, 0.0
    %144 = vadd.xlane.f32.xlu0 %v143
    %v145 = vpop.xlane.xlu0 %144
    %v146 = vsel %vm55, %v51, 0.0
    %147 = vadd.xlane.f32.xlu0 %v146
    %v148 = vpop.xlane.xlu0 %147
    %v149 = vsel %vm55, %v52, 0.0
    %150 = vadd.xlane.f32.xlu0 %v149
    %v151 = vpop.xlane.xlu0 %150
    %v152 = vrcp.pop 16.0
    %v153 = vmul.f32 %v58, %v152
    %v154 = vmul.f32 %v61, %v152
    %v155 = vmul.f32 %v64, %v152
    %v156 = vmul.f32 %v67, %v152
    %v157 = vmul.f32 %v70, %v152
    %v158 = vmul.f32 %v73, %v152
    %v159 = vmul.f32 %v76, %v152
    %v160 = vmul.f32 %v79, %v152
    %v161 = vmul.f32 %v82, %v152
    %v162 = vmul.f32 %v85, %v152
    %v163 = vmul.f32 %v88, %v152
    %v164 = vmul.f32 %v91, %v152
    %v165 = vmul.f32 %v94, %v152
    %v166 = vmul.f32 %v97, %v152
    %v167 = vmul.f32 %v100, %v152
    %v168 = vmul.f32 %v103, %v152
    %v169 = vmul.f32 %v106, %v152
    %v170 = vmul.f32 %v109, %v152
    %v171 = vmul.f32 %v112, %v152
    %v172 = vmul.f32 %v115, %v152
    %v173 = vmul.f32 %v118, %v152
    %v174 = vmul.f32 %v121, %v152
    %v175 = vmul.f32 %v124, %v152
    %v176 = vmul.f32 %v127, %v152
    %v177 = vmul.f32 %v130, %v152
    %v178 = vmul.f32 %v133, %v152
    %v179 = vmul.f32 %v136, %v152
    %v180 = vmul.f32 %v139, %v152
    %v181 = vmul.f32 %v142, %v152
    %v182 = vmul.f32 %v145, %v152
    %v183 = vmul.f32 %v148, %v152
    %v184 = vmul.f32 %v151, %v152
    %v185 = vsub.f32 %v21, %v153
    %v186 = vsub.f32 %v22, %v154
    %v187 = vsub.f32 %v23, %v155
    %v188 = vsub.f32 %v24, %v156
    %v189 = vsub.f32 %v25, %v157
    %v190 = vsub.f32 %v26, %v158
    %v191 = vsub.f32 %v27, %v159
    %v192 = vsub.f32 %v28, %v160
    %v193 = vsub.f32 %v29, %v161
    %v194 = vsub.f32 %v30, %v162
    %v195 = vsub.f32 %v31, %v163
    %v196 = vsub.f32 %v32, %v164
    %v197 = vsub.f32 %v33, %v165
    %v198 = vsub.f32 %v34, %v166
    %v199 = vsub.f32 %v35, %v167
    %v200 = vsub.f32 %v36, %v168
    %v201 = vsub.f32 %v37, %v169
    %v202 = vsub.f32 %v38, %v170
    %v203 = vsub.f32 %v39, %v171
    %v204 = vsub.f32 %v40, %v172
    %v205 = vsub.f32 %v41, %v173
    %v206 = vsub.f32 %v42, %v174
    %v207 = vsub.f32 %v43, %v175
    %v208 = vsub.f32 %v44, %v176
    %v209 = vsub.f32 %v45, %v177
    %v210 = vsub.f32 %v46, %v178
    %v211 = vsub.f32 %v47, %v179
    %v212 = vsub.f32 %v48, %v180
    %v213 = vsub.f32 %v49, %v181
    %v214 = vsub.f32 %v50, %v182
    %v215 = vsub.f32 %v51, %v183
    %v216 = vsub.f32 %v52, %v184
    %v217 = vmul.f32 %v185, %v185
    %v218 = vmul.f32 %v186, %v186
    %v219 = vmul.f32 %v187, %v187
    %v220 = vmul.f32 %v188, %v188
    %v221 = vmul.f32 %v189, %v189
    %v222 = vmul.f32 %v190, %v190
    %v223 = vmul.f32 %v191, %v191
    %v224 = vmul.f32 %v192, %v192
    %v225 = vmul.f32 %v193, %v193
    %v226 = vmul.f32 %v194, %v194
    %v227 = vmul.f32 %v195, %v195
    %v228 = vmul.f32 %v196, %v196
    %v229 = vmul.f32 %v197, %v197
    %v230 = vmul.f32 %v198, %v198
    %v231 = vmul.f32 %v199, %v199
    %v232 = vmul.f32 %v200, %v200
    %v233 = vmul.f32 %v201, %v201
    %v234 = vmul.f32 %v202, %v202
    %v235 = vmul.f32 %v203, %v203
    %v236 = vmul.f32 %v204, %v204
    %v237 = vmul.f32 %v205, %v205
    %v238 = vmul.f32 %v206, %v206
    %v239 = vmul.f32 %v207, %v207
    %v240 = vmul.f32 %v208, %v208
    %v241 = vmul.f32 %v209, %v209
    %v242 = vmul.f32 %v210, %v210
    %v243 = vmul.f32 %v211, %v211
    %v244 = vmul.f32 %v212, %v212
    %v245 = vmul.f32 %v213, %v213
    %v246 = vmul.f32 %v214, %v214
    %v247 = vmul.f32 %v215, %v215
    %v248 = vmul.f32 %v216, %v216
    %v249 = vsel %vm55, %v217, 0.0
    %250 = vadd.xlane.f32.xlu0 %v249
    %v251 = vpop.xlane.xlu0 %250
    %v252 = vsel %vm55, %v218, 0.0
    %253 = vadd.xlane.f32.xlu0 %v252
    %v254 = vpop.xlane.xlu0 %253
    %v255 = vsel %vm55, %v219, 0.0
    %256 = vadd.xlane.f32.xlu0 %v255
    %v257 = vpop.xlane.xlu0 %256
    %v258 = vsel %vm55, %v220, 0.0
    %259 = vadd.xlane.f32.xlu0 %v258
    %v260 = vpop.xlane.xlu0 %259
    %v261 = vsel %vm55, %v221, 0.0
    %262 = vadd.xlane.f32.xlu0 %v261
    %v263 = vpop.xlane.xlu0 %262
    %v264 = vsel %vm55, %v222, 0.0
    %265 = vadd.xlane.f32.xlu0 %v264
    %v266 = vpop.xlane.xlu0 %265
    %v267 = vsel %vm55, %v223, 0.0
    %268 = vadd.xlane.f32.xlu0 %v267
    %v269 = vpop.xlane.xlu0 %268
    %v270 = vsel %vm55, %v224, 0.0
    %271 = vadd.xlane.f32.xlu0 %v270
    %v272 = vpop.xlane.xlu0 %271
    %v273 = vsel %vm55, %v225, 0.0
    %274 = vadd.xlane.f32.xlu0 %v273
    %v275 = vpop.xlane.xlu0 %274
    %v276 = vsel %vm55, %v226, 0.0
    %277 = vadd.xlane.f32.xlu0 %v276
    %v278 = vpop.xlane.xlu0 %277
    %v279 = vsel %vm55, %v227, 0.0
    %280 = vadd.xlane.f32.xlu0 %v279
    %v281 = vpop.xlane.xlu0 %280
    %v282 = vsel %vm55, %v228, 0.0
    %283 = vadd.xlane.f32.xlu0 %v282
    %v284 = vpop.xlane.xlu0 %283
    %v285 = vsel %vm55, %v229, 0.0
    %286 = vadd.xlane.f32.xlu0 %v285
    %v287 = vpop.xlane.xlu0 %286
    %v288 = vsel %vm55, %v230, 0.0
    %289 = vadd.xlane.f32.xlu0 %v288
    %v290 = vpop.xlane.xlu0 %289
    %v291 = vsel %vm55, %v231, 0.0
    %292 = vadd.xlane.f32.xlu0 %v291
    %v293 = vpop.xlane.xlu0 %292
    %v294 = vsel %vm55, %v232, 0.0
    %295 = vadd.xlane.f32.xlu0 %v294
    %v296 = vpop.xlane.xlu0 %295
    %v297 = vsel %vm55, %v233, 0.0
    %298 = vadd.xlane.f32.xlu0 %v297
    %v299 = vpop.xlane.xlu0 %298
    %v300 = vsel %vm55, %v234, 0.0
    %301 = vadd.xlane.f32.xlu0 %v300
    %v302 = vpop.xlane.xlu0 %301
    %v303 = vsel %vm55, %v235, 0.0
    %304 = vadd.xlane.f32.xlu0 %v303
    %v305 = vpop.xlane.xlu0 %304
    %v306 = vsel %vm55, %v236, 0.0
    %307 = vadd.xlane.f32.xlu0 %v306
    %v308 = vpop.xlane.xlu0 %307
    %v309 = vsel %vm55, %v237, 0.0
    %310 = vadd.xlane.f32.xlu0 %v309
    %v311 = vpop.xlane.xlu0 %310
    %v312 = vsel %vm55, %v238, 0.0
    %313 = vadd.xlane.f32.xlu0 %v312
    %v314 = vpop.xlane.xlu0 %313
    %v315 = vsel %vm55, %v239, 0.0
    %316 = vadd.xlane.f32.xlu0 %v315
    %v317 = vpop.xlane.xlu0 %316
    %v318 = vsel %vm55, %v240, 0.0
    %319 = vadd.xlane.f32.xlu0 %v318
    %v320 = vpop.xlane.xlu0 %319
    %v321 = vsel %vm55, %v241, 0.0
    %322 = vadd.xlane.f32.xlu0 %v321
    %v323 = vpop.xlane.xlu0 %322
    %v324 = vsel %vm55, %v242, 0.0
    %325 = vadd.xlane.f32.xlu0 %v324
    %v326 = vpop.xlane.xlu0 %325
    %v327 = vsel %vm55, %v243, 0.0
    %328 = vadd.xlane.f32.xlu0 %v327
    %v329 = vpop.xlane.xlu0 %328
    %v330 = vsel %vm55, %v244, 0.0
    %331 = vadd.xlane.f32.xlu0 %v330
    %v332 = vpop.xlane.xlu0 %331
    %v333 = vsel %vm55, %v245, 0.0
    %334 = vadd.xlane.f32.xlu0 %v333
    %v335 = vpop.xlane.xlu0 %334
    %v336 = vsel %vm55, %v246, 0.0
    %337 = vadd.xlane.f32.xlu0 %v336
    %v338 = vpop.xlane.xlu0 %337
    %v339 = vsel %vm55, %v247, 0.0
    %340 = vadd.xlane.f32.xlu0 %v339
    %v341 = vpop.xlane.xlu0 %340
    %v342 = vsel %vm55, %v248, 0.0
    %343 = vadd.xlane.f32.xlu0 %v342
    %v344 = vpop.xlane.xlu0 %343
    %v345 = vmul.f32 %v251, %v152
    %v346 = vmul.f32 %v254, %v152
    %v347 = vmul.f32 %v257, %v152
    %v348 = vmul.f32 %v260, %v152
    %v349 = vmul.f32 %v263, %v152
    %v350 = vmul.f32 %v266, %v152
    %v351 = vmul.f32 %v269, %v152
    %v352 = vmul.f32 %v272, %v152
    %v353 = vmul.f32 %v275, %v152
    %v354 = vmul.f32 %v278, %v152
    %v355 = vmul.f32 %v281, %v152
    %v356 = vmul.f32 %v284, %v152
    %v357 = vmul.f32 %v287, %v152
    %v358 = vmul.f32 %v290, %v152
    %v359 = vmul.f32 %v293, %v152
    %v360 = vmul.f32 %v296, %v152
    %v361 = vmul.f32 %v299, %v152
    %v362 = vmul.f32 %v302, %v152
    %v363 = vmul.f32 %v305, %v152
    %v364 = vmul.f32 %v308, %v152
    %v365 = vmul.f32 %v311, %v152
    %v366 = vmul.f32 %v314, %v152
    %v367 = vmul.f32 %v317, %v152
    %v368 = vmul.f32 %v320, %v152
    %v369 = vmul.f32 %v323, %v152
    %v370 = vmul.f32 %v326, %v152
    %v371 = vmul.f32 %v329, %v152
    %v372 = vmul.f32 %v332, %v152
    %v373 = vmul.f32 %v335, %v152
    %v374 = vmul.f32 %v338, %v152
    %v375 = vmul.f32 %v341, %v152
    %v376 = vmul.f32 %v344, %v152
    %v377 = vadd.f32 %v345, 1e-05
    %v378 = vadd.f32 %v346, 1e-05
    %v379 = vadd.f32 %v347, 1e-05
    %v380 = vadd.f32 %v348, 1e-05
    %v381 = vadd.f32 %v349, 1e-05
    %v382 = vadd.f32 %v350, 1e-05
    %v383 = vadd.f32 %v351, 1e-05
    %v384 = vadd.f32 %v352, 1e-05
    %v385 = vadd.f32 %v353, 1e-05
    %v386 = vadd.f32 %v354, 1e-05
    %v387 = vadd.f32 %v355, 1e-05
    %v388 = vadd.f32 %v356, 1e-05
    %v389 = vadd.f32 %v357, 1e-05
    %v390 = vadd.f32 %v358, 1e-05
    %v391 = vadd.f32 %v359, 1e-05
    %v392 = vadd.f32 %v360, 1e-05
    %v393 = vadd.f32 %v361, 1e-05
    %v394 = vadd.f32 %v362, 1e-05
    %v395 = vadd.f32 %v363, 1e-05
    %v396 = vadd.f32 %v364, 1e-05
    %v397 = vadd.f32 %v365, 1e-05
    %v398 = vadd.f32 %v366, 1e-05
    %v399 = vadd.f32 %v367, 1e-05
    %v400 = vadd.f32 %v368, 1e-05
    %v401 = vadd.f32 %v369, 1e-05
    %v402 = vadd.f32 %v370, 1e-05
    %v403 = vadd.f32 %v371, 1e-05
    %v404 = vadd.f32 %v372, 1e-05
    %v405 = vadd.f32 %v373, 1e-05
    %v406 = vadd.f32 %v374, 1e-05
    %v407 = vadd.f32 %v375, 1e-05
    %v408 = vadd.f32 %v376, 1e-05
    %v409 = vrsqrt.pop %v377
    %v410 = vrsqrt.pop %v378
    %v411 = vrsqrt.pop %v379
    %v412 = vrsqrt.pop %v380
    %v413 = vrsqrt.pop %v381
    %v414 = vrsqrt.pop %v382
    %v415 = vrsqrt.pop %v383
    %v416 = vrsqrt.pop %v384
    %v417 = vrsqrt.pop %v385
    %v418 = vrsqrt.pop %v386
    %v419 = vrsqrt.pop %v387
    %v420 = vrsqrt.pop %v388
    %v421 = vrsqrt.pop %v389
    %v422 = vrsqrt.pop %v390
    %v423 = vrsqrt.pop %v391
    %v424 = vrsqrt.pop %v392
    %v425 = vrsqrt.pop %v393
    %v426 = vrsqrt.pop %v394
    %v427 = vrsqrt.pop %v395
    %v428 = vrsqrt.pop %v396
    %v429 = vrsqrt.pop %v397
    %v430 = vrsqrt.pop %v398
    %v431 = vrsqrt.pop %v399
    %v432 = vrsqrt.pop %v400
    %v433 = vrsqrt.pop %v401
    %v434 = vrsqrt.pop %v402
    %v435 = vrsqrt.pop %v403
    %v436 = vrsqrt.pop %v404
    %v437 = vrsqrt.pop %v405
    %v438 = vrsqrt.pop %v406
    %v439 = vrsqrt.pop %v407
    %v440 = vrsqrt.pop %v408
    %v441 = vmul.f32 %v185, %v409
    %v442 = vmul.f32 %v186, %v410
    %v443 = vmul.f32 %v187, %v411
    %v444 = vmul.f32 %v188, %v412
    %v445 = vmul.f32 %v189, %v413
    %v446 = vmul.f32 %v190, %v414
    %v447 = vmul.f32 %v191, %v415
    %v448 = vmul.f32 %v192, %v416
    %v449 = vmul.f32 %v193, %v417
    %v450 = vmul.f32 %v194, %v418
    %v451 = vmul.f32 %v195, %v419
    %v452 = vmul.f32 %v196, %v420
    %v453 = vmul.f32 %v197, %v421
    %v454 = vmul.f32 %v198, %v422
    %v455 = vmul.f32 %v199, %v423
    %v456 = vmul.f32 %v200, %v424
    %v457 = vmul.f32 %v201, %v425
    %v458 = vmul.f32 %v202, %v426
    %v459 = vmul.f32 %v203, %v427
    %v460 = vmul.f32 %v204, %v428
    %v461 = vmul.f32 %v205, %v429
    %v462 = vmul.f32 %v206, %v430
    %v463 = vmul.f32 %v207, %v431
    %v464 = vmul.f32 %v208, %v432
    %v465 = vmul.f32 %v209, %v433
    %v466 = vmul.f32 %v210, %v434
    %v467 = vmul.f32 %v211, %v435
    %v468 = vmul.f32 %v212, %v436
    %v469 = vmul.f32 %v213, %v437
    %v470 = vmul.f32 %v214, %v438
    %v471 = vmul.f32 %v215, %v439
    %v472 = vmul.f32 %v216, %v440
    %v474 = vlaneseq
    %v475 = vshrl.u32 %v474, 7
    %v476 = vsub.s32 0, %v475
    %v477 = vrot.slane %v53, %v476
    %v479 = vmul.f32 %v441, %v477
    %v480 = vmul.f32 %v442, %v477
    %v481 = vmul.f32 %v443, %v477
    %v482 = vmul.f32 %v444, %v477
    %v483 = vmul.f32 %v445, %v477
    %v484 = vmul.f32 %v446, %v477
    %v485 = vmul.f32 %v447, %v477
    %v486 = vmul.f32 %v448, %v477
    %v487 = vmul.f32 %v449, %v477
    %v488 = vmul.f32 %v450, %v477
    %v489 = vmul.f32 %v451, %v477
    %v490 = vmul.f32 %v452, %v477
    %v491 = vmul.f32 %v453, %v477
    %v492 = vmul.f32 %v454, %v477
    %v493 = vmul.f32 %v455, %v477
    %v494 = vmul.f32 %v456, %v477
    %v495 = vmul.f32 %v457, %v477
    %v496 = vmul.f32 %v458, %v477
    %v497 = vmul.f32 %v459, %v477
    %v498 = vmul.f32 %v460, %v477
    %v499 = vmul.f32 %v461, %v477
    %v500 = vmul.f32 %v462, %v477
    %v501 = vmul.f32 %v463, %v477
    %v502 = vmul.f32 %v464, %v477
    %v503 = vmul.f32 %v465, %v477
    %v504 = vmul.f32 %v466, %v477
    %v505 = vmul.f32 %v467, %v477
    %v506 = vmul.f32 %v468, %v477
    %v507 = vmul.f32 %v469, %v477
    %v508 = vmul.f32 %v470, %v477
    %v509 = vmul.f32 %v471, %v477
    %v510 = vmul.f32 %v472, %v477
    %v512 = vlaneseq
    %v513 = vshrl.u32 %v512, 7
    %v514 = vsub.s32 0, %v513
    %v515 = vrot.slane %v54, %v514
    %v517 = vadd.f32 %v479, %v515
    %v518 = vadd.f32 %v480, %v515
    %v519 = vadd.f32 %v481, %v515
    %v520 = vadd.f32 %v482, %v515
    %v521 = vadd.f32 %v483, %v515
    %v522 = vadd.f32 %v484, %v515
    %v523 = vadd.f32 %v485, %v515
    %v524 = vadd.f32 %v486, %v515
    %v525 = vadd.f32 %v487, %v515
    %v526 = vadd.f32 %v488, %v515
    %v527 = vadd.f32 %v489, %v515
    %v528 = vadd.f32 %v490, %v515
    %v529 = vadd.f32 %v491, %v515
    %v530 = vadd.f32 %v492, %v515
    %v531 = vadd.f32 %v493, %v515
    %v532 = vadd.f32 %v494, %v515
    %v533 = vadd.f32 %v495, %v515
    %v534 = vadd.f32 %v496, %v515
    %v535 = vadd.f32 %v497, %v515
    %v536 = vadd.f32 %v498, %v515
    %v537 = vadd.f32 %v499, %v515
    %v538 = vadd.f32 %v500, %v515
    %v539 = vadd.f32 %v501, %v515
    %v540 = vadd.f32 %v502, %v515
    %v541 = vadd.f32 %v503, %v515
    %v542 = vadd.f32 %v504, %v515
    %v543 = vadd.f32 %v505, %v515
    %v544 = vadd.f32 %v506, %v515
    %v545 = vadd.f32 %v507, %v515
    %v546 = vadd.f32 %v508, %v515
    %v547 = vadd.f32 %v509, %v515
    %v548 = vadd.f32 %v510, %v515
    %v549 = vld [vmem:[%s3] sm:$0xff]
    %v550 = vld [vmem:[%s3 + $0x8] sm:$0xff]
    %v552 = vsel %vm55, %v517, 0
    %v555 = vsel %vm55, %v518, 0
    %v558 = vsel %vm55, %v519, 0
    %v561 = vsel %vm55, %v520, 0
    %v564 = vsel %vm55, %v521, 0
    %v567 = vsel %vm55, %v522, 0
    %v570 = vsel %vm55, %v523, 0
    %v573 = vsel %vm55, %v524, 0
    %v576 = vsel %vm55, %v525, 0
    %v579 = vsel %vm55, %v526, 0
    %v582 = vsel %vm55, %v527, 0
    %v585 = vsel %vm55, %v528, 0
    %v588 = vsel %vm55, %v529, 0
    %v591 = vsel %vm55, %v530, 0
    %v594 = vsel %vm55, %v531, 0
    %v597 = vsel %vm55, %v532, 0
    %v600 = vsel %vm55, %v533, 0
    %v603 = vsel %vm55, %v534, 0
    %v606 = vsel %vm55, %v535, 0
    %v609 = vsel %vm55, %v536, 0
    %v612 = vsel %vm55, %v537, 0
    %v615 = vsel %vm55, %v538, 0
    %v618 = vsel %vm55, %v539, 0
    %v621 = vsel %vm55, %v540, 0
    %v624 = vsel %vm55, %v541, 0
    %v627 = vsel %vm55, %v542, 0
    %v630 = vsel %vm55, %v543, 0
    %v633 = vsel %vm55, %v544, 0
    %v636 = vsel %vm55, %v545, 0
    %v639 = vsel %vm55, %v546, 0
    %v642 = vsel %vm55, %v547, 0
    %v645 = vsel %vm55, %v548, 0
    %647 = vmatprep.subr.mxu0 0.0
    %648 = vmatpush1.msra.mxu0 %v549
    %649 = vmatprep.subr.mxu0 0.0
    %650 = vmatpush1.msra.mxu0 %v550
    %651 = vmatprep.subr.mxu0 0.0
    %652 = vmatpush1.msra.mxu0 0.0
    %653 = vmatprep.subr.mxu0 0.0
    %654 = vmatpush1.msra.mxu0 0.0
    %655 = vmatprep.subr.mxu0 0.0
    %656 = vmatpush1.msra.mxu0 0.0
    %657 = vmatprep.subr.mxu0 0.0
    %658 = vmatpush1.msra.mxu0 0.0
    %659 = vmatprep.subr.mxu0 0.0
    %660 = vmatpush1.msra.mxu0 0.0
    %661 = vmatprep.subr.mxu0 0.0
    %662 = vmatpush1.msra.mxu0 0.0
    %663 = vmatprep.subr.mxu0 0.0
    %664 = vmatpush1.msra.mxu0 0.0
    %665 = vmatprep.subr.mxu0 0.0
    %666 = vmatpush1.msra.mxu0 0.0
    %667 = vmatprep.subr.mxu0 0.0
    %668 = vmatpush1.msra.mxu0 0.0
    %669 = vmatprep.subr.mxu0 0.0
    %670 = vmatpush1.msra.mxu0 0.0
    %671 = vmatprep.subr.mxu0 0.0
    %672 = vmatpush1.msra.mxu0 0.0
    %673 = vmatprep.subr.mxu0 0.0
    %674 = vmatpush1.msra.mxu0 0.0
    %675 = vmatprep.subr.mxu0 0.0
    %676 = vmatpush1.msra.mxu0 0.0
    %677 = vmatprep.subr.mxu0 0.0
    %678 = vmatpush1.msra.mxu0 0.0
    %679 = vmatprep.subr.mxu0 0.0
    %680 = vmatpush1.msra.mxu0 0.0
    %681 = vmatprep.subr.mxu0 0.0
    %682 = vmatpush1.msra.mxu0 0.0
    %683 = vmatprep.subr.mxu0 0.0
    %684 = vmatpush1.msra.mxu0 0.0
    %685 = vmatprep.subr.mxu0 0.0
    %686 = vmatpush1.msra.mxu0 0.0
    %687 = vmatprep.subr.mxu0 0.0
    %688 = vmatpush1.msra.mxu0 0.0
    %689 = vmatprep.subr.mxu0 0.0
    %690 = vmatpush1.msra.mxu0 0.0
    %691 = vmatprep.subr.mxu0 0.0
    %692 = vmatpush1.msra.mxu0 0.0
    %693 = vmatprep.subr.mxu0 0.0
    %694 = vmatpush1.msra.mxu0 0.0
    %695 = vmatprep.subr.mxu0 0.0
    %696 = vmatpush1.msra.mxu0 0.0
    %697 = vmatprep.subr.mxu0 0.0
    %698 = vmatpush1.msra.mxu0 0.0
    %699 = vmatprep.subr.mxu0 0.0
    %700 = vmatpush1.msra.mxu0 0.0
    %701 = vmatprep.subr.mxu0 0.0
    %702 = vmatpush1.msra.mxu0 0.0
    %703 = vmatprep.subr.mxu0 0.0
    %704 = vmatpush1.msra.mxu0 0.0
    %705 = vmatprep.subr.mxu0 0.0
    %706 = vmatpush1.msra.mxu0 0.0
    %707 = vmatprep.subr.mxu0 0.0
    %708 = vmatpush1.msra.mxu0 0.0
    %709 = vmatprep.subr.mxu0 0.0
    %710 = vmatpush1.msra.mxu0 0.0
    %711 = vmatprep.mubr.f32.mxu0 0.0
    %712 = vmatmul.mubr.f32.gmra.mrb[0].mxu0 %v552
    %v713 = vpop.f32.mrb[0].mxu0
    %v714 = vadd.f32 0.0, %v713
    %v715 = vpop.f32.mrb[0].mxu0
    %716 = vmatprep.mubr.f32.mxu0 0.0
    %717 = vmatmul.mubr.f32.gmra.mrb[0].mxu0 %v555
    %v718 = vpop.f32.mrb[0].mxu0
    %v719 = vadd.f32 0.0, %v718
    %v720 = vpop.f32.mrb[0].mxu0
    %721 = vmatprep.mubr.f32.mxu0 0.0
    %722 = vmatmul.mubr.f32.gmra.mrb[0].mxu0 %v558
    %v723 = vpop.f32.mrb[0].mxu0
    %v724 = vadd.f32 0.0, %v723
    %v725 = vpop.f32.mrb[0].mxu0
    %726 = vmatprep.mubr.f32.mxu0 0.0
    %727 = vmatmul.mubr.f32.gmra.mrb[0].mxu0 %v561
    %v728 = vpop.f32.mrb[0].mxu0
    %v729 = vadd.f32 0.0, %v728
    %v730 = vpop.f32.mrb[0].mxu0
    %731 = vmatprep.mubr.f32.mxu0 0.0
    %732 = vmatmul.mubr.f32.gmra.mrb[0].mxu0 %v564
    %v733 = vpop.f32.mrb[0].mxu0
    %v734 = vadd.f32 0.0, %v733
    %v735 = vpop.f32.mrb[0].mxu0
    %736 = vmatprep.mubr.f32.mxu0 0.0
    %737 = vmatmul.mubr.f32.gmra.mrb[0].mxu0 %v567
    %v738 = vpop.f32.mrb[0].mxu0
    %v739 = vadd.f32 0.0, %v738
    %v740 = vpop.f32.mrb[0].mxu0
    %741 = vmatprep.mubr.f32.mxu0 0.0
    %742 = vmatmul.mubr.f32.gmra.mrb[0].mxu0 %v570
    %v743 = vpop.f32.mrb[0].mxu0
    %v744 = vadd.f32 0.0, %v743
    %v745 = vpop.f32.mrb[0].mxu0
    %746 = vmatprep.mubr.f32.mxu0 0.0
    %747 = vmatmul.mubr.f32.gmra.mrb[0].mxu0 %v573
    %v748 = vpop.f32.mrb[0].mxu0
    %v749 = vadd.f32 0.0, %v748
    %v750 = vpop.f32.mrb[0].mxu0
    %751 = vmatprep.mubr.f32.mxu0 0.0
    %752 = vmatmul.mubr.f32.gmra.mrb[0].mxu0 %v576
    %v753 = vpop.f32.mrb[0].mxu0
    %v754 = vadd.f32 0.0, %v753
    %v755 = vpop.f32.mrb[0].mxu0
    %756 = vmatprep.mubr.f32.mxu0 0.0
    %757 = vmatmul.mubr.f32.gmra.mrb[0].mxu0 %v579
    %v758 = vpop.f32.mrb[0].mxu0
    %v759 = vadd.f32 0.0, %v758
    %v760 = vpop.f32.mrb[0].mxu0
    %761 = vmatprep.mubr.f32.mxu0 0.0
    %762 = vmatmul.mubr.f32.gmra.mrb[0].mxu0 %v582
    %v763 = vpop.f32.mrb[0].mxu0
    %v764 = vadd.f32 0.0, %v763
    %v765 = vpop.f32.mrb[0].mxu0
    %766 = vmatprep.mubr.f32.mxu0 0.0
    %767 = vmatmul.mubr.f32.gmra.mrb[0].mxu0 %v585
    %v768 = vpop.f32.mrb[0].mxu0
    %v769 = vadd.f32 0.0, %v768
    %v770 = vpop.f32.mrb[0].mxu0
    %771 = vmatprep.mubr.f32.mxu0 0.0
    %772 = vmatmul.mubr.f32.gmra.mrb[0].mxu0 %v588
    %v773 = vpop.f32.mrb[0].mxu0
    %v774 = vadd.f32 0.0, %v773
    %v775 = vpop.f32.mrb[0].mxu0
    %776 = vmatprep.mubr.f32.mxu0 0.0
    %777 = vmatmul.mubr.f32.gmra.mrb[0].mxu0 %v591
    %v778 = vpop.f32.mrb[0].mxu0
    %v779 = vadd.f32 0.0, %v778
    %v780 = vpop.f32.mrb[0].mxu0
    %781 = vmatprep.mubr.f32.mxu0 0.0
    %782 = vmatmul.mubr.f32.gmra.mrb[0].mxu0 %v594
    %v783 = vpop.f32.mrb[0].mxu0
    %v784 = vadd.f32 0.0, %v783
    %v785 = vpop.f32.mrb[0].mxu0
    %786 = vmatprep.mubr.f32.mxu0 0.0
    %787 = vmatmul.mubr.f32.gmra.mrb[0].mxu0 %v597
    %v788 = vpop.f32.mrb[0].mxu0
    %v789 = vadd.f32 0.0, %v788
    %v790 = vpop.f32.mrb[0].mxu0
    %791 = vmatprep.mubr.f32.mxu0 0.0
    %792 = vmatmul.mubr.f32.gmra.mrb[0].mxu0 %v600
    %v793 = vpop.f32.mrb[0].mxu0
    %v794 = vadd.f32 0.0, %v793
    %v795 = vpop.f32.mrb[0].mxu0
    %796 = vmatprep.mubr.f32.mxu0 0.0
    %797 = vmatmul.mubr.f32.gmra.mrb[0].mxu0 %v603
    %v798 = vpop.f32.mrb[0].mxu0
    %v799 = vadd.f32 0.0, %v798
    %v800 = vpop.f32.mrb[0].mxu0
    %801 = vmatprep.mubr.f32.mxu0 0.0
    %802 = vmatmul.mubr.f32.gmra.mrb[0].mxu0 %v606
    %v803 = vpop.f32.mrb[0].mxu0
    %v804 = vadd.f32 0.0, %v803
    %v805 = vpop.f32.mrb[0].mxu0
    %806 = vmatprep.mubr.f32.mxu0 0.0
    %807 = vmatmul.mubr.f32.gmra.mrb[0].mxu0 %v609
    %v808 = vpop.f32.mrb[0].mxu0
    %v809 = vadd.f32 0.0, %v808
    %v810 = vpop.f32.mrb[0].mxu0
    %811 = vmatprep.mubr.f32.mxu0 0.0
    %812 = vmatmul.mubr.f32.gmra.mrb[0].mxu0 %v612
    %v813 = vpop.f32.mrb[0].mxu0
    %v814 = vadd.f32 0.0, %v813
    %v815 = vpop.f32.mrb[0].mxu0
    %816 = vmatprep.mubr.f32.mxu0 0.0
    %817 = vmatmul.mubr.f32.gmra.mrb[0].mxu0 %v615
    %v818 = vpop.f32.mrb[0].mxu0
    %v819 = vadd.f32 0.0, %v818
    %v820 = vpop.f32.mrb[0].mxu0
    %821 = vmatprep.mubr.f32.mxu0 0.0
    %822 = vmatmul.mubr.f32.gmra.mrb[0].mxu0 %v618
    %v823 = vpop.f32.mrb[0].mxu0
    %v824 = vadd.f32 0.0, %v823
    %v825 = vpop.f32.mrb[0].mxu0
    %826 = vmatprep.mubr.f32.mxu0 0.0
    %827 = vmatmul.mubr.f32.gmra.mrb[0].mxu0 %v621
    %v828 = vpop.f32.mrb[0].mxu0
    %v829 = vadd.f32 0.0, %v828
    %v830 = vpop.f32.mrb[0].mxu0
    %831 = vmatprep.mubr.f32.mxu0 0.0
    %832 = vmatmul.mubr.f32.gmra.mrb[0].mxu0 %v624
    %v833 = vpop.f32.mrb[0].mxu0
    %v834 = vadd.f32 0.0, %v833
    %v835 = vpop.f32.mrb[0].mxu0
    %836 = vmatprep.mubr.f32.mxu0 0.0
    %837 = vmatmul.mubr.f32.gmra.mrb[0].mxu0 %v627
    %v838 = vpop.f32.mrb[0].mxu0
    %v839 = vadd.f32 0.0, %v838
    %v840 = vpop.f32.mrb[0].mxu0
    %841 = vmatprep.mubr.f32.mxu0 0.0
    %842 = vmatmul.mubr.f32.gmra.mrb[0].mxu0 %v630
    %v843 = vpop.f32.mrb[0].mxu0
    %v844 = vadd.f32 0.0, %v843
    %v845 = vpop.f32.mrb[0].mxu0
    %846 = vmatprep.mubr.f32.mxu0 0.0
    %847 = vmatmul.mubr.f32.gmra.mrb[0].mxu0 %v633
    %v848 = vpop.f32.mrb[0].mxu0
    %v849 = vadd.f32 0.0, %v848
    %v850 = vpop.f32.mrb[0].mxu0
    %851 = vmatprep.mubr.f32.mxu0 0.0
    %852 = vmatmul.mubr.f32.gmra.mrb[0].mxu0 %v636
    %v853 = vpop.f32.mrb[0].mxu0
    %v854 = vadd.f32 0.0, %v853
    %v855 = vpop.f32.mrb[0].mxu0
    %856 = vmatprep.mubr.f32.mxu0 0.0
    %857 = vmatmul.mubr.f32.gmra.mrb[0].mxu0 %v639
    %v858 = vpop.f32.mrb[0].mxu0
    %v859 = vadd.f32 0.0, %v858
    %v860 = vpop.f32.mrb[0].mxu0
    %861 = vmatprep.mubr.f32.mxu0 0.0
    %862 = vmatmul.mubr.f32.gmra.mrb[0].mxu0 %v642
    %v863 = vpop.f32.mrb[0].mxu0
    %v864 = vadd.f32 0.0, %v863
    %v865 = vpop.f32.mrb[0].mxu0
    %866 = vmatprep.mubr.f32.mxu0 0.0
    %867 = vmatmul.mubr.f32.gmra.mrb[0].mxu0 %v645
    %v868 = vpop.f32.mrb[0].mxu0
    %v869 = vadd.f32 0.0, %v868
    %v870 = vpop.f32.mrb[0].mxu0
    %871 = vdwg.mxu0
    %872 = vxpose.xlu0.b32.start [1/16] %v714, 128
    %873 = vxpose.xlu0.b32.cont [2/16] %v719, 128
    %874 = vxpose.xlu0.b32.cont [3/16] %v724, 128
    %875 = vxpose.xlu0.b32.cont [4/16] %v729, 128
    %876 = vxpose.xlu0.b32.cont [5/16] %v734, 128
    %877 = vxpose.xlu0.b32.cont [6/16] %v739, 128
    %878 = vxpose.xlu0.b32.cont [7/16] %v744, 128
    %879 = vxpose.xlu0.b32.cont [8/16] %v749, 128
    %880 = vxpose.xlu0.b32.cont [9/16] %v754, 128
    %881 = vxpose.xlu0.b32.cont [10/16] %v759, 128
    %882 = vxpose.xlu0.b32.cont [11/16] %v764, 128
    %883 = vxpose.xlu0.b32.cont [12/16] %v769, 128
    %884 = vxpose.xlu0.b32.cont [13/16] %v774, 128
    %885 = vxpose.xlu0.b32.cont [14/16] %v779, 128
    %886 = vxpose.xlu0.b32.cont [15/16] %v784, 128
    %887 = vxpose.xlu0.b32.end [16/16] %v789, 128
    %v888 = vpop.trf.xlu0
    %v889 = vpop.trf.xlu0
    %v890 = vpop.trf.xlu0
    %v891 = vpop.trf.xlu0
    %v892 = vpop.trf.xlu0
    %v893 = vpop.trf.xlu0
    %v894 = vpop.trf.xlu0
    %v895 = vpop.trf.xlu0
    %v896 = vpop.trf.xlu0
    %v897 = vpop.trf.xlu0
    %v898 = vpop.trf.xlu0
    %v899 = vpop.trf.xlu0
    %v900 = vpop.trf.xlu0
    %v901 = vpop.trf.xlu0
    %v902 = vpop.trf.xlu0
    %v903 = vpop.trf.xlu0
    %904 = vxpose.xlu0.b32.start [1/16] %v794, 128
    %905 = vxpose.xlu0.b32.cont [2/16] %v799, 128
    %906 = vxpose.xlu0.b32.cont [3/16] %v804, 128
    %907 = vxpose.xlu0.b32.cont [4/16] %v809, 128
    %908 = vxpose.xlu0.b32.cont [5/16] %v814, 128
    %909 = vxpose.xlu0.b32.cont [6/16] %v819, 128
    %910 = vxpose.xlu0.b32.cont [7/16] %v824, 128
    %911 = vxpose.xlu0.b32.cont [8/16] %v829, 128
    %912 = vxpose.xlu0.b32.cont [9/16] %v834, 128
    %913 = vxpose.xlu0.b32.cont [10/16] %v839, 128
    %914 = vxpose.xlu0.b32.cont [11/16] %v844, 128
    %915 = vxpose.xlu0.b32.cont [12/16] %v849, 128
    %916 = vxpose.xlu0.b32.cont [13/16] %v854, 128
    %917 = vxpose.xlu0.b32.cont [14/16] %v859, 128
    %918 = vxpose.xlu0.b32.cont [15/16] %v864, 128
    %919 = vxpose.xlu0.b32.end [16/16] %v869, 128
    %v920 = vpop.trf.xlu0
    %v921 = vpop.trf.xlu0
    %v922 = vpop.trf.xlu0
    %v923 = vpop.trf.xlu0
    %v924 = vpop.trf.xlu0
    %v925 = vpop.trf.xlu0
    %v926 = vpop.trf.xlu0
    %v927 = vpop.trf.xlu0
    %v928 = vpop.trf.xlu0
    %v929 = vpop.trf.xlu0
    %v930 = vpop.trf.xlu0
    %v931 = vpop.trf.xlu0
    %v932 = vpop.trf.xlu0
    %v933 = vpop.trf.xlu0
    %v934 = vpop.trf.xlu0
    %v935 = vpop.trf.xlu0
    %v936 = vld [vmem:[%s4] sm:$0xff]
    %938 = vset.pattern.permute.xlu0 0
    %939 = vperm.xlu0 %938, %v936
    %v940 = vpop.permute.xlu0 %939
    %v942 = vadd.f32 %v888, %v940
    %v943 = vadd.f32 %v920, %v940
    %944 = vst [vmem:[#allocation2] sm:$0xff] %v942
    %945 = vst [vmem:[#allocation2 + $0x8] sm:$0xff] %v943
    // Predicated region
    $region22: #{tpu_custom_call.1} parent=1 // pred_check
      _
    $region23: #{tpu_custom_call.1} parent=1 // pred_check_branch
      %947 = sbr.rel (0) target = $region25
    $region24: #{tpu_custom_call.1} parent=1 // pred_region
      %s949 = ssub.s32 256, 256
      %950 = vsyncadd [#allocation3], %s949
      %s952 = sshll.u32 [#allocation2], 4
      %s953 = int_to_ptr.vmem [resolvable:$true] %s952
      %955 = dma.vmem_to_hbm [thread:$0]  %s953, 256, %s5, [#allocation3]
    $region25: #{tpu_custom_call.1} parent=1 // pred_fallthru
      _
    // Predicated region
    $region26: #{tpu_custom_call.1} parent=1 // pred_check
      _
    $region27: #{tpu_custom_call.1} parent=1 // pred_check_branch
      %957 = sbr.rel (0) target = $region29
    $region28: #{tpu_custom_call.1} parent=1 // pred_region
      %958 = dma.done [#allocation3], 256
    $region29: #{tpu_custom_call.1} parent=1 // pred_fallthru
      _
    %959 = vsyncpa [#allocation3], 1

</llo_original>
